<compile_context>
chip_gen: v6e
topology: v6e:2x2x1
jax: 0.10.0
libtpu: 0.0.40
codegen_flags: <defaults>
</compile_context>

<pallas_src>
import math

import jax
import jax.numpy as jnp
from jax import lax
from jax.experimental import pallas as pl
from jax.experimental.pallas import tpu as pltpu


# ----------------------------------------------------------------------------
# Fused kernel
# ----------------------------------------------------------------------------

def _make_fused_kernel(layer_dims, time_shape, linear_shape):
    """Build the fused ClassifyNet forward kernel body.

    Ref order: x, times, t2v_pack, [layer_pack]*n_layers, out.
    layer_dims: list of (din, dout) per layer (static; loop unrolled at trace).
    """
    n_layers = len(layer_dims)

    def kernel(x_ref, t_ref, t2v_ref, *rest):
        layer_refs = rest[:n_layers]
        o_ref = rest[n_layers]

        # ---- Time2Vec(1, T): pure VPU (broadcast multiply), no MXU.
        # t2v_ref row 0 = fused weight (1, T), row 1 = fused bias (1, T).
        t = t_ref[...]                                        # (TB, 1)
        tv = t2v_ref[...]                                     # (2, T)
        z = t * tv[0:1, :] + tv[1:2, :]                       # (TB, T)
        lane = lax.broadcasted_iota(jnp.int32, (1, time_shape), 1)
        te = jnp.where(lane >= linear_shape, jnp.sin(z), z)   # (TB, T)

        # ---- Fused Linear + leaky TimeReLU layers: two dots per layer,
        # weights sliced from one packed, sublane-aligned ref (no concat).
        x = x_ref[...]                                        # (TB, din0)
        for li, (din, dout) in enumerate(layer_dims):
            w_ref = layer_refs[li]                            # (8 + din + T, 2*dout)
            b = w_ref[0:1, :]                                 # (1, 2*dout)
            h = (jnp.dot(x, w_ref[8:8 + din, :],
                         preferred_element_type=jnp.float32)
                 + jnp.dot(te, w_ref[8 + din:8 + din + time_shape, :],
                           preferred_element_type=jnp.float32)
                 + b)                                         # (TB, 2*dout)
            d = h[:, :dout]          # = y - threshold
            a = h[:, dout:]          # = alpha
            x = jnp.where(d > 0.0, d, a * d)                  # TimeReLU (leaky)

        # ---- task != 'regression' -> numerically stable softmax (exact divide
        # so rows sum to 1 to f32 precision).
        m = jnp.max(x, axis=1, keepdims=True)
        e = jnp.exp(x - m)
        s = jnp.sum(e, axis=1, keepdims=True)
        o_ref[...] = e / s

    return kernel


def classify_net_forward(params, X, times, *, batch_tile=128):
    """Single fused pallas_call for the whole ClassifyNet forward pass."""
    B, din0 = X.shape
    layer_dims = params["layer_dims"]
    out_dim = layer_dims[-1][1]

    # Batch tiling: one grid step at small B; 128-row tiles once batched.
    TB = B if B <= batch_tile else batch_tile
    assert B % TB == 0, "batch must be divisible by the batch tile"
    n_tiles = B // TB

    args = [X, times, params["t2v_pack"]] + [lp["pack"] for lp in params["layers"]]

    in_specs = [
        pl.BlockSpec((TB, din0), lambda i: (i, 0)),
        pl.BlockSpec((TB, 1), lambda i: (i, 0)),
        pl.BlockSpec(params["t2v_pack"].shape, lambda i: (0, 0)),
    ] + [
        pl.BlockSpec(lp["pack"].shape, lambda i: (0, 0))   # weights VMEM-resident
        for lp in params["layers"]
    ]
    out_specs = pl.BlockSpec((TB, out_dim), lambda i: (i, 0))

    kernel = _make_fused_kernel(layer_dims, params["time_shape"],
                                params["linear_shape"])
    return pl.pallas_call(
        kernel,
        out_shape=jax.ShapeDtypeStruct((B, out_dim), jnp.float32),
        grid=(n_tiles,),
        in_specs=in_specs,
        out_specs=out_specs,
        compiler_params=pltpu.CompilerParams(
            dimension_semantics=("parallel",)),
    )(*args)


# ----------------------------------------------------------------------------
# Parameter construction (deterministic, mirrors the PyTorch __init__ shapes)
# ----------------------------------------------------------------------------

def xavier_normal(key, out_f, in_f):
    std = math.sqrt(2.0 / (in_f + out_f))
    return std * jax.random.normal(key, (out_f, in_f), dtype=jnp.float32)


def build_params(key, input_shape, hidden_shapes, output_shape, time_shape=8):
    keys = iter(jax.random.split(key, 128))
    params = {"time_shape": time_shape}

    # Time2Vec(1, 8): linear_shape = 8 // 4 = 2, sine_shape = 6.
    linear_shape = time_shape // 4
    params["linear_shape"] = linear_shape
    w0 = xavier_normal(next(keys), linear_shape, 1)               # (2, 1)
    w1 = xavier_normal(next(keys), time_shape - linear_shape, 1)  # (6, 1)
    b0 = 0.01 * jax.random.normal(next(keys), (linear_shape,), dtype=jnp.float32)
    b1 = 0.01 * jax.random.normal(next(keys), (time_shape - linear_shape,),
                                  dtype=jnp.float32)
    # Fused (1, T) weight/bias matching concat([lin, sin], axis=1).
    t2v_w = jnp.concatenate([w0, w1], axis=0).T                   # (1, T)
    t2v_b = jnp.concatenate([b0, b1])[None, :]                    # (1, T)
    params["t2v_w"], params["t2v_b"] = t2v_w, t2v_b
    params["t2v_pack"] = jnp.concatenate([t2v_w, t2v_b], axis=0)  # (2, T)

    dims = [input_shape] + list(hidden_shapes) + [output_shape]
    layers = []
    layer_dims = []
    for i in range(len(dims) - 1):
        din, dout = dims[i], dims[i + 1]
        w = xavier_normal(next(keys), dout, din)                  # Linear weight
        b = 0.01 * jax.random.normal(next(keys), (dout,), dtype=jnp.float32)
        wt = xavier_normal(next(keys), dout, time_shape)          # TimeReLU thr
        bt = 0.01 * jax.random.normal(next(keys), (dout,), dtype=jnp.float32)
        wa = xavier_normal(next(keys), dout, time_shape)          # TimeReLU alpha
        ba = 0.01 * jax.random.normal(next(keys), (dout,), dtype=jnp.float32)

        # Packed per-layer params (all row offsets multiples of 8):
        #   rows 0..7       : combined bias [b - bt | ba] in row 0, rest zero
        #   rows 8..8+din   : W_x  = [ W.T | 0    ]   -> feeds d
        #   rows ...+T      : W_te = [-Wt.T| Wa.T ]   -> feeds d and alpha
        b_comb = jnp.concatenate([b - bt, ba])[None, :]                    # (1, 2*dout)
        b_block = jnp.concatenate(
            [b_comb, jnp.zeros((7, 2 * dout), jnp.float32)], axis=0)       # (8, 2*dout)
        w_x = jnp.concatenate([w.T, jnp.zeros((din, dout), jnp.float32)],
                              axis=1)                                      # (din, 2*dout)
        w_te = jnp.concatenate([-wt.T, wa.T], axis=1)                      # (T, 2*dout)
        pack = jnp.concatenate([b_block, w_x, w_te], axis=0)    # (8+din+T, 2*dout)

        layers.append(dict(
            pack=pack,
            # raw pre-transposed (used by the pure-JAX reference)
            w=w.T, b=b[None, :],
            wt=wt.T, bt=bt[None, :],
            wa=wa.T, ba=ba[None, :],
        ))
        layer_dims.append((din, dout))
    params["layers"] = layers
    params["layer_dims"] = layer_dims
    return params


# ----------------------------------------------------------------------------
# Pure-JAX reference (unfused form, for correctness checking)
# ----------------------------------------------------------------------------

def classify_net_reference(params, X, times):
    ls = params["linear_shape"]
    z = times @ params["t2v_w"] + params["t2v_b"]
    te = jnp.concatenate([z[:, :ls], jnp.sin(z[:, ls:])], axis=1)
    for lp in params["layers"]:
        y = X @ lp["w"] + lp["b"]
        thr = te @ lp["wt"] + lp["bt"]
        alp = te @ lp["wa"] + lp["ba"]
        X = jnp.where(y > thr, y - thr, alp * (y - thr))
    return jax.nn.softmax(X, axis=1)


# ----------------------------------------------------------------------------

if __name__ == "__main__":
    B, IN, HID, OUT = 8, 32, [64], 16

    key = jax.random.PRNGKey(0)
    kx, kt, kp = jax.random.split(key, 3)
    X = jax.random.normal(kx, (B, IN), dtype=jnp.float32)
    times = jax.random.uniform(kt, (B, 1), dtype=jnp.float32)

    params = build_params(kp, IN, HID, OUT, time_shape=8)

    out = classify_net_forward(params, X, times)
    out = jax.block_until_ready(out)

    ref = classify_net_reference(params, X, times)
    assert out.shape == (B, OUT)
    assert jnp.allclose(out, ref, atol=1e-5, rtol=1e-5), "mismatch vs reference"
    assert jnp.allclose(jnp.sum(out, axis=1), 1.0, atol=1e-5), "softmax rows != 1"

    print("KERNEL_OK")
</pallas_src>

<mosaic_0001>
module attributes {stable_mosaic.version = 11 : i64} {
  func.func @kernel(%arg0: i32, %arg1: memref<8x32xf32, #tpu.memory_space<vmem>>, %arg2: memref<8x1xf32, #tpu.memory_space<vmem>>, %arg3: memref<2x8xf32, #tpu.memory_space<vmem>>, %arg4: memref<48x128xf32, #tpu.memory_space<vmem>>, %arg5: memref<80x32xf32, #tpu.memory_space<vmem>>, %arg6: memref<8x16xf32, #tpu.memory_space<vmem>>) attributes {dimension_semantics = [#tpu.dimension_semantics<parallel>], iteration_bounds = array<i64: 1>, scalar_prefetch = 0 : i64, scratch_operands = 0 : i64, tpu.core_type = #tpu.core_type<tc>, window_params = [{transform_indices = @transform_0, window_bounds = array<i64: 8, 32>}, {transform_indices = @transform_1, window_bounds = array<i64: 8, 1>}, {pipeline_mode = #tpu.pipeline_mode<synchronous>, transform_indices = @transform_2, window_bounds = array<i64: 2, 8>}, {pipeline_mode = #tpu.pipeline_mode<synchronous>, transform_indices = @transform_3, window_bounds = array<i64: 48, 128>}, {pipeline_mode = #tpu.pipeline_mode<synchronous>, transform_indices = @transform_4, window_bounds = array<i64: 80, 32>}, {transform_indices = @transform_5, window_bounds = array<i64: 8, 16>}]} {
    %c0 = arith.constant 0 : index
    %c0_0 = arith.constant 0 : index
    %0 = vector.load %arg2[%c0, %c0_0] : memref<8x1xf32, #tpu.memory_space<vmem>>, vector<8x1xf32>
    %c0_1 = arith.constant 0 : index
    %c0_2 = arith.constant 0 : index
    %1 = vector.load %arg3[%c0_1, %c0_2] : memref<2x8xf32, #tpu.memory_space<vmem>>, vector<2x8xf32>
    %2 = vector.extract_strided_slice %1 {offsets = [0, 0], sizes = [1, 8], strides = [1, 1]} : vector<2x8xf32> to vector<1x8xf32>
    %3 = vector.broadcast %0 : vector<8x1xf32> to vector<8x8xf32>
    %4 = vector.broadcast %2 : vector<1x8xf32> to vector<8x8xf32>
    %5 = arith.mulf %3, %4 : vector<8x8xf32>
    %6 = vector.extract_strided_slice %1 {offsets = [1, 0], sizes = [1, 8], strides = [1, 1]} : vector<2x8xf32> to vector<1x8xf32>
    %7 = vector.broadcast %6 : vector<1x8xf32> to vector<8x8xf32>
    %8 = arith.addf %5, %7 : vector<8x8xf32>
    %9 = tpu.iota {dimensions = array<i32: 1>} : vector<1x8xi32>
    %c2_i32 = arith.constant 2 : i32
    %10 = vector.broadcast %c2_i32 : i32 to vector<1x8xi32>
    %11 = arith.cmpi sge, %9, %10 : vector<1x8xi32>
    %12 = math.sin %8 : vector<8x8xf32>
    %13 = vector.shape_cast %11 : vector<1x8xi1> to vector<1x8xi1>
    %14 = vector.broadcast %13 : vector<1x8xi1> to vector<8x8xi1>
    %15 = arith.select %14, %12, %8 : vector<8x8xi1>, vector<8x8xf32>
    %c0_3 = arith.constant 0 : index
    %c0_4 = arith.constant 0 : index
    %16 = vector.load %arg1[%c0_3, %c0_4] : memref<8x32xf32, #tpu.memory_space<vmem>>, vector<8x32xf32>
    %c0_5 = arith.constant 0 : index
    %c0_6 = arith.constant 0 : index
    %17 = vector.load %arg4[%c0_5, %c0_6] : memref<48x128xf32, #tpu.memory_space<vmem>>, vector<1x128xf32>
    %c8 = arith.constant 8 : index
    %c0_7 = arith.constant 0 : index
    %18 = vector.load %arg4[%c8, %c0_7] : memref<48x128xf32, #tpu.memory_space<vmem>>, vector<32x128xf32>
    %cst = arith.constant dense<0.000000e+00> : vector<8x128xf32>
    %19 = tpu.matmul %16, %18, %cst {dimension_numbers = #tpu.dot_dimension_numbers<[1], [0], [0], [1], [0, 0, 1, 1], [], []>} : vector<8x32xf32>, vector<32x128xf32>, vector<8x128xf32> -> vector<8x128xf32>
    %c40 = arith.constant 40 : index
    %c0_8 = arith.constant 0 : index
    %20 = vector.load %arg4[%c40, %c0_8] : memref<48x128xf32, #tpu.memory_space<vmem>>, vector<8x128xf32>
    %cst_9 = arith.constant dense<0.000000e+00> : vector<8x128xf32>
    %21 = tpu.matmul %15, %20, %cst_9 {dimension_numbers = #tpu.dot_dimension_numbers<[1], [0], [0], [1], [0, 0, 1, 1], [], []>} : vector<8x8xf32>, vector<8x128xf32>, vector<8x128xf32> -> vector<8x128xf32>
    %22 = arith.addf %19, %21 : vector<8x128xf32>
    %23 = vector.broadcast %17 : vector<1x128xf32> to vector<8x128xf32>
    %24 = arith.addf %22, %23 : vector<8x128xf32>
    %25 = vector.extract_strided_slice %24 {offsets = [0, 0], sizes = [8, 64], strides = [1, 1]} : vector<8x128xf32> to vector<8x64xf32>
    %26 = vector.extract_strided_slice %24 {offsets = [0, 64], sizes = [8, 64], strides = [1, 1]} : vector<8x128xf32> to vector<8x64xf32>
    %cst_10 = arith.constant 0.000000e+00 : f32
    %27 = vector.broadcast %cst_10 : f32 to vector<8x64xf32>
    %28 = arith.cmpf ogt, %25, %27 : vector<8x64xf32>
    %29 = arith.mulf %26, %25 : vector<8x64xf32>
    %30 = arith.select %28, %25, %29 : vector<8x64xi1>, vector<8x64xf32>
    %c0_11 = arith.constant 0 : index
    %c0_12 = arith.constant 0 : index
    %31 = vector.load %arg5[%c0_11, %c0_12] : memref<80x32xf32, #tpu.memory_space<vmem>>, vector<1x32xf32>
    %c8_13 = arith.constant 8 : index
    %c0_14 = arith.constant 0 : index
    %32 = vector.load %arg5[%c8_13, %c0_14] : memref<80x32xf32, #tpu.memory_space<vmem>>, vector<64x32xf32>
    %cst_15 = arith.constant dense<0.000000e+00> : vector<8x32xf32>
    %33 = tpu.matmul %30, %32, %cst_15 {dimension_numbers = #tpu.dot_dimension_numbers<[1], [0], [0], [1], [0, 0, 1, 1], [], []>} : vector<8x64xf32>, vector<64x32xf32>, vector<8x32xf32> -> vector<8x32xf32>
    %c72 = arith.constant 72 : index
    %c0_16 = arith.constant 0 : index
    %34 = vector.load %arg5[%c72, %c0_16] : memref<80x32xf32, #tpu.memory_space<vmem>>, vector<8x32xf32>
    %cst_17 = arith.constant dense<0.000000e+00> : vector<8x32xf32>
    %35 = tpu.matmul %15, %34, %cst_17 {dimension_numbers = #tpu.dot_dimension_numbers<[1], [0], [0], [1], [0, 0, 1, 1], [], []>} : vector<8x8xf32>, vector<8x32xf32>, vector<8x32xf32> -> vector<8x32xf32>
    %36 = arith.addf %33, %35 : vector<8x32xf32>
    %37 = vector.broadcast %31 : vector<1x32xf32> to vector<8x32xf32>
    %38 = arith.addf %36, %37 : vector<8x32xf32>
    %39 = vector.extract_strided_slice %38 {offsets = [0, 0], sizes = [8, 16], strides = [1, 1]} : vector<8x32xf32> to vector<8x16xf32>
    %40 = vector.extract_strided_slice %38 {offsets = [0, 16], sizes = [8, 16], strides = [1, 1]} : vector<8x32xf32> to vector<8x16xf32>
    %cst_18 = arith.constant 0.000000e+00 : f32
    %41 = vector.broadcast %cst_18 : f32 to vector<8x16xf32>
    %42 = arith.cmpf ogt, %39, %41 : vector<8x16xf32>
    %43 = arith.mulf %40, %39 : vector<8x16xf32>
    %44 = arith.select %42, %39, %43 : vector<8x16xi1>, vector<8x16xf32>
    %cst_19 = arith.constant dense<0xFF800000> : vector<8xf32>
    %45 = vector.multi_reduction <maximumf>, %44, %cst_19 [1] : vector<8x16xf32> to vector<8xf32>
    %46 = vector.shape_cast %45 : vector<8xf32> to vector<8x1xf32>
    %47 = vector.broadcast %46 : vector<8x1xf32> to vector<8x16xf32>
    %48 = arith.subf %44, %47 : vector<8x16xf32>
    %49 = math.exp %48 : vector<8x16xf32>
    %cst_20 = arith.constant dense<0.000000e+00> : vector<8xf32>
    %50 = vector.multi_reduction <add>, %49, %cst_20 [1] : vector<8x16xf32> to vector<8xf32>
    %51 = vector.shape_cast %50 : vector<8xf32> to vector<8x1xf32>
    %52 = vector.broadcast %51 : vector<8x1xf32> to vector<8x16xf32>
    %53 = arith.divf %49, %52 : vector<8x16xf32>
    %c0_21 = arith.constant 0 : index
    %c0_22 = arith.constant 0 : index
    %54 = vector.load %arg6[%c0_21, %c0_22] : memref<8x16xf32, #tpu.memory_space<vmem>>, vector<8x16xf32>
    tpu.vector_store %arg6[%c0_21, %c0_22], %53 {strides = array<i32>} : memref<8x16xf32, #tpu.memory_space<vmem>>, vector<8x16xf32>,
    return
  }
  func.func @transform_0(%arg0: i32) -> (i32, i32) {
    %c0_i32 = arith.constant 0 : i32
    %c0_i32_0 = arith.constant 0 : i32
    return %arg0, %c0_i32 : i32, i32
  }
  func.func @transform_1(%arg0: i32) -> (i32, i32) {
    %c0_i32 = arith.constant 0 : i32
    %c0_i32_0 = arith.constant 0 : i32
    return %arg0, %c0_i32 : i32, i32
  }
  func.func @transform_2(%arg0: i32) -> (i32, i32) {
    %c0_i32 = arith.constant 0 : i32
    %c0_i32_0 = arith.constant 0 : i32
    %c0_i32_1 = arith.constant 0 : i32
    return %c0_i32, %c0_i32_0 : i32, i32
  }
  func.func @transform_3(%arg0: i32) -> (i32, i32) {
    %c0_i32 = arith.constant 0 : i32
    %c0_i32_0 = arith.constant 0 : i32
    %c0_i32_1 = arith.constant 0 : i32
    return %c0_i32, %c0_i32_0 : i32, i32
  }
  func.func @transform_4(%arg0: i32) -> (i32, i32) {
    %c0_i32 = arith.constant 0 : i32
    %c0_i32_0 = arith.constant 0 : i32
    %c0_i32_1 = arith.constant 0 : i32
    return %c0_i32, %c0_i32_0 : i32, i32
  }
  func.func @transform_5(%arg0: i32) -> (i32, i32) {
    %c0_i32 = arith.constant 0 : i32
    %c0_i32_0 = arith.constant 0 : i32
    return %arg0, %c0_i32 : i32, i32
  }
}

</mosaic_0001>

<llo_original>
// kernel: tpu_custom_call.1
$region0: #{tpu_custom_call.1}
  #allocation0 [shape = 'u32[]', space=smem, size = 0x4, offset = 0x4, fixed_abs, tag = 'smem constant byte address 0x4 - core index']
  #allocation1 [shape = 'u32[144,128]{1,0:T(1,128)}', space=vmem, size = 0x12000, scoped, tag = 'internal scratch']
  %s0 = inlined_call_operand.vmem [shape: f32[8,32], index: 0, kind: input, shape index: {}]
  %s1 = inlined_call_operand.vmem [shape: f32[8,1], index: 1, kind: input, shape index: {}]
  %s2 = inlined_call_operand.vmem [shape: f32[2,8], index: 2, kind: input, shape index: {}]
  %s3 = inlined_call_operand.vmem [shape: f32[48,128], index: 3, kind: input, shape index: {}]
  %s4 = inlined_call_operand.vmem [shape: f32[80,32], index: 4, kind: input, shape index: {}]
  %s5 = inlined_call_operand.hbm [shape: f32[8,16], index: 5, kind: output, shape index: {}]
  %s6 = sld [smem:[#allocation0]]
  $region30: #{tpu_custom_call.1} parent=0
    _
  %s8 = ssub.s32 1, %s6
  %s9 = scalar_select 0, %s8, %s6
  $region1: #{tpu_custom_call.1} parent=0
    #allocation2 [shape = 'u8[4096]{0}', space=vmem, size = 0x1000, scoped, tag = 'output window, operand 0, single buffered']
    #allocation3 [shape = 's32[1]{0}', space=sflag, size = 0x4, scoped, tag = 'scoped memory for tpu_custom_call.1']
    %10 = vsyncpa [#allocation3], 0
    // Predicated region
    $region2: #{tpu_custom_call.1} parent=1 // pred_check
      _
    $region3: #{tpu_custom_call.1} parent=1 // pred_check_branch
      %12 = sbr.rel (0) target = $region5
    $region4: #{tpu_custom_call.1} parent=1 // pred_region
      _
    $region5: #{tpu_custom_call.1} parent=1 // pred_fallthru
      _
    // Predicated region
    $region6: #{tpu_custom_call.1} parent=1 // pred_check
      _
    $region7: #{tpu_custom_call.1} parent=1 // pred_check_branch
      %14 = sbr.rel (0) target = $region9
    $region8: #{tpu_custom_call.1} parent=1 // pred_region
      _
    $region9: #{tpu_custom_call.1} parent=1 // pred_fallthru
      _
    // Predicated region
    $region10: #{tpu_custom_call.1} parent=1 // pred_check
      _
    $region11: #{tpu_custom_call.1} parent=1 // pred_check_branch
      %16 = sbr.rel (0) target = $region13
    $region12: #{tpu_custom_call.1} parent=1 // pred_region
      _
    $region13: #{tpu_custom_call.1} parent=1 // pred_fallthru
      _
    // Predicated region
    $region14: #{tpu_custom_call.1} parent=1 // pred_check
      _
    $region15: #{tpu_custom_call.1} parent=1 // pred_check_branch
      %18 = sbr.rel (0) target = $region17
    $region16: #{tpu_custom_call.1} parent=1 // pred_region
      _
    $region17: #{tpu_custom_call.1} parent=1 // pred_fallthru
      _
    // Predicated region
    $region18: #{tpu_custom_call.1} parent=1 // pred_check
      _
    $region19: #{tpu_custom_call.1} parent=1 // pred_check_branch
      %20 = sbr.rel (0) target = $region21
    $region20: #{tpu_custom_call.1} parent=1 // pred_region
      _
    $region21: #{tpu_custom_call.1} parent=1 // pred_fallthru
      _
    %v21 = vld [vmem:[%s1] sm:$0xff]
    %v22 = vld [vmem:[%s2] sm:$0x3]
    %24 = vset.pattern.permute.xlu0 0
    %25 = vperm.xlu0 %24, %v21
    %v26 = vpop.permute.xlu0 %25
    %v28 = vlaneseq
    %v29 = vshrl.u32 %v28, 7
    %v30 = vsub.s32 0, %v29
    %v31 = vrot.slane %v22, %v30
    %v32 = vmul.f32 %v26, %v31
    %v33 = vlaneseq
    %v34 = vshrl.u32 %v33, 7
    %v35 = vsub.s32 1, %v34
    %v36 = vrot.slane %v22, %v35
    %v37 = vadd.f32 %v32, %v36
    %v38 = vlaneseq
    %v39 = vand.u32 %v38, 127
    %vm40 = vcmp.ge.s32.totalorder %v39, 2
    %v41 = vand.u32 2147483647, %v37
    %vm42 = vcmp.le.f32.partialorder %v41, 0.7853982
    %vm43 = vcmp.lt.s32.totalorder %v37, 0
    %v44 = vand.u32 %v37, 2139095040
    %v45 = vshrl.u32 %v44, 23
    %v46 = vsub.s32 %v45, 127
    %v47 = vand.u32 2147483647, %v37
    %v48 = vand.u32 %v47, 8388607
    %v49 = vor.u32 %v48, 8388608
    %v50 = vsub.s32 0, %v49
    %v51 = vadd.s32 %v46, 1
    %vm52 = vcmp.gt.s32.totalorder %v51, 0
    %v53 = vsel %vm52, %v51, 0
    %v54 = vshrl.u32 %v53, 5
    %v55 = vand.u32 %v53, 31
    %v56 = vsub.s32 32, %v55
    %v57 = vshrl.u32 683565275, %v56
    %v58 = vshll.u32 683565275, %v55
    %v59 = vshrl.u32 2475754826, %v56
    %v60 = vor.u32 %v58, %v59
    %v61 = vshll.u32 2475754826, %v55
    %v62 = vshrl.u32 2131351028, %v56
    %v63 = vor.u32 %v61, %v62
    %v64 = vshll.u32 2131351028, %v55
    %v65 = vshrl.u32 2102212464, %v56
    %v66 = vor.u32 %v64, %v65
    %v67 = vshll.u32 2102212464, %v55
    %v68 = vshrl.u32 920167782, %v56
    %v69 = vor.u32 %v67, %v68
    %v70 = vshll.u32 920167782, %v55
    %v71 = vshrl.u32 1326507024, %v56
    %v72 = vor.u32 %v70, %v71
    %vm73 = vcmp.lt.s32.totalorder %v54, 1
    %vm74 = vcmp.lt.s32.totalorder %v54, 2
    %vm75 = vcmp.lt.s32.totalorder %v54, 3
    %vm76 = vcmp.lt.s32.totalorder %v54, 4
    %v77 = vsel %vm73, %v57, %v60
    %v78 = vsel %vm76, %v66, 2102212464
    %v79 = vsel %vm75, %v63, %v78
    %v80 = vsel %vm74, %v77, %v79
    %v81 = vsel %vm73, %v60, %v63
    %v82 = vsel %vm76, %v69, 920167782
    %v83 = vsel %vm75, %v66, %v82
    %v84 = vsel %vm74, %v81, %v83
    %v85 = vsel %vm73, %v63, %v66
    %v86 = vsel %vm76, %v72, 1326507024
    %v87 = vsel %vm75, %v69, %v86
    %v88 = vsel %vm74, %v85, %v87
    %v89 = vshll.u32 %v49, 8
    %v90 = vmul.u32.u64.compose %v89, %v88
    %v91 = vextract.low.u32 %v90
    %v92 = vextract.high.u32 %v90
    %v93 = vmul.u32.u64.compose %v89, %v84
    %v94 = vextract.low.u32 %v93
    %v95 = vextract.high.u32 %v93
    %v96 = vmul.u32 %v89, %v80
    %v97 = vadd.s32 %v92, %v94
    %vm98 = vc.u32 %v92, %v94
    %v99 = vadd.s32 %v95, 1
    %v100 = vsel %vm98, %v99, %v95
    %v101 = vadd.s32 %v96, %v100
    %v102 = vadd.s32 %v101, 536870912
    %v103 = vshrl.u32 %v102, 30
    %v104 = vshll.u32 %v103, 30
    %v105 = vsub.s32 %v101, %v104
    %vm106 = vcmp.lt.s32.totalorder %v105, 0
    %v107 = vsub.s32 0, %v105
    %v108 = vsel %vm106, %v107, %v105
    %v109 = vclz %v108
    %v110 = vsub.s32 %v109, 2
    %vm111 = vcmp.gt.s32.totalorder 0, %v110
    %v112 = vsel %vm111, 0, %v110
    %v113 = vsub.s32 32, %v112
    %v114 = vshll.u32 %v105, %v112
    %v115 = vshrl.u32 %v97, %v113
    %v116 = vor.u32 %v114, %v115
    %v117 = vsub.s32 4294967266, %v112
    %v118 = vadd.s32 %v117, 127
    %v119 = vshll.u32 %v118, 23
    %v120 = vor.u32 4788187, %v119
    %v121 = vand.u32 2147483647, %v120
    %v123 = vcvt.s32.f32 %v116
    %v124 = vmul.f32 %v123, %v121
    %v125 = vxor.u32 %v124, 2147483648
    %v126 = vsel %vm43, %v125, %v124
    %v127 = vsub.s32 4, %v103
    %v128 = vsel %vm43, %v127, %v103
    %v129 = vsel %vm42, %v37, %v126
    %v130 = vsel %vm42, 0, %v128
    %v131 = vcosq.f32.pop %v129
    %v132 = vsinq.f32.pop %v129
    %vm133 = vweird.f32 %v37
    %v134 = vadd.s32 %v130, 3
    %v135 = vand.u32 %v134, 3
    %vm136 = vcmp.lt.s32.totalorder %v135, 2
    %vm137 = vcmp.eq.s32.totalorder %v135, 0
    %v138 = vxor.u32 %v132, 2147483648
    %v139 = vsel %vm137, %v131, %v138
    %vm140 = vcmp.eq.s32.totalorder %v135, 2
    %v141 = vxor.u32 %v131, 2147483648
    %v142 = vsel %vm140, %v141, %v132
    %v143 = vsel %vm136, %v139, %v142
    %v144 = vsel %vm133, nan, %v143
    %v145 = vsel %vm40, 1, 0
    %vm146 = vcmp.eq.s32.totalorder %v145, 1
    %v147 = vsel %vm146, %v144, %v37
    %v148 = vld [vmem:[%s0] sm:$0xff]
    %v149 = vld [vmem:[%s3] sm:$0x1]
    %v150 = vld [vmem:[%s3 + $0x8] sm:$0xff]
    %v151 = vld [vmem:[%s3 + $0x10] sm:$0xff]
    %v152 = vld [vmem:[%s3 + $0x18] sm:$0xff]
    %v153 = vld [vmem:[%s3 + $0x20] sm:$0xff]
    %v154 = vld [vmem:[%s3 + $0x28] sm:$0xff]
    %vm155 = vcmask 64512
    %v157 = vsel %vm155, %v147, 0
    %159 = vmatprep.subr.mxu0 0.0
    %160 = vmatpush1.msra.mxu0 0.0
    %161 = vmatprep.subr.mxu0 0.0
    %162 = vmatpush1.msra.mxu0 0.0
    %163 = vmatprep.subr.mxu0 0.0
    %164 = vmatpush1.msra.mxu0 0.0
    %165 = vmatprep.subr.mxu0 0.0
    %166 = vmatpush1.msra.mxu0 0.0
    %167 = vmatprep.subr.mxu0 0.0
    %168 = vmatpush1.msra.mxu0 0.0
    %169 = vmatprep.subr.mxu0 0.0
    %170 = vmatpush1.msra.mxu0 0.0
    %171 = vmatprep.subr.mxu0 0.0
    %172 = vmatpush1.msra.mxu0 0.0
    %173 = vmatprep.subr.mxu0 0.0
    %174 = vmatpush1.msra.mxu0 0.0
    %175 = vmatprep.subr.mxu0 0.0
    %176 = vmatpush1.msra.mxu0 0.0
    %177 = vmatprep.subr.mxu0 0.0
    %178 = vmatpush1.msra.mxu0 0.0
    %179 = vmatprep.subr.mxu0 0.0
    %180 = vmatpush1.msra.mxu0 0.0
    %181 = vmatprep.subr.mxu0 0.0
    %182 = vmatpush1.msra.mxu0 0.0
    %183 = vmatprep.subr.mxu0 0.0
    %184 = vmatpush1.msra.mxu0 0.0
    %185 = vmatprep.subr.mxu0 0.0
    %186 = vmatpush1.msra.mxu0 0.0
    %187 = vmatprep.subr.mxu0 0.0
    %188 = vmatpush1.msra.mxu0 0.0
    %189 = vmatprep.subr.mxu0 0.0
    %190 = vmatpush1.msra.mxu0 %v154
    %191 = vmatprep.subr.mxu0 0.0
    %192 = vmatpush2.msra.mxu0 0.0
    %193 = vmatprep.subr.mxu0 0.0
    %194 = vmatpush2.msra.mxu0 0.0
    %195 = vmatprep.subr.mxu0 0.0
    %196 = vmatpush2.msra.mxu0 0.0
    %197 = vmatprep.subr.mxu0 0.0
    %198 = vmatpush2.msra.mxu0 0.0
    %199 = vmatprep.subr.mxu0 0.0
    %200 = vmatpush2.msra.mxu0 0.0
    %201 = vmatprep.subr.mxu0 0.0
    %202 = vmatpush2.msra.mxu0 0.0
    %203 = vmatprep.subr.mxu0 0.0
    %204 = vmatpush2.msra.mxu0 0.0
    %205 = vmatprep.subr.mxu0 0.0
    %206 = vmatpush2.msra.mxu0 0.0
    %207 = vmatprep.subr.mxu0 0.0
    %208 = vmatpush2.msra.mxu0 0.0
    %209 = vmatprep.subr.mxu0 0.0
    %210 = vmatpush2.msra.mxu0 0.0
    %211 = vmatprep.subr.mxu0 0.0
    %212 = vmatpush2.msra.mxu0 0.0
    %213 = vmatprep.subr.mxu0 0.0
    %214 = vmatpush2.msra.mxu0 0.0
    %215 = vmatprep.subr.mxu0 0.0
    %216 = vmatpush2.msra.mxu0 0.0
    %217 = vmatprep.subr.mxu0 0.0
    %218 = vmatpush2.msra.mxu0 0.0
    %219 = vmatprep.subr.mxu0 0.0
    %220 = vmatpush2.msra.mxu0 0.0
    %221 = vmatprep.subr.mxu0 0.0
    %222 = vmatpush2.msra.mxu0 0.0
    %223 = vmatprep.mubr.f32.mxu0 0.0
    %224 = vmatmul.mubr.f32.gmra.mxu0 %v157
    %v225 = vpop.f32.mrf.mxu0
    %v226 = vadd.f32 0.0, %v225
    %v227 = vpop.f32.mrf.mxu0
    %228 = vdwg.mxu0
    %vm229 = vcmask 261120
    %v231 = vsel %vm229, %v148, 0
    %233 = vmatprep.subr.mxu0 0.0
    %234 = vmatpush1.msra.mxu0 0.0
    %235 = vmatprep.subr.mxu0 0.0
    %236 = vmatpush1.msra.mxu0 0.0
    %237 = vmatprep.subr.mxu0 0.0
    %238 = vmatpush1.msra.mxu0 0.0
    %239 = vmatprep.subr.mxu0 0.0
    %240 = vmatpush1.msra.mxu0 0.0
    %241 = vmatprep.subr.mxu0 0.0
    %242 = vmatpush1.msra.mxu0 0.0
    %243 = vmatprep.subr.mxu0 0.0
    %244 = vmatpush1.msra.mxu0 0.0
    %245 = vmatprep.subr.mxu0 0.0
    %246 = vmatpush1.msra.mxu0 0.0
    %247 = vmatprep.subr.mxu0 0.0
    %248 = vmatpush1.msra.mxu0 0.0
    %249 = vmatprep.subr.mxu0 0.0
    %250 = vmatpush1.msra.mxu0 0.0
    %251 = vmatprep.subr.mxu0 0.0
    %252 = vmatpush1.msra.mxu0 0.0
    %253 = vmatprep.subr.mxu0 0.0
    %254 = vmatpush1.msra.mxu0 0.0
    %255 = vmatprep.subr.mxu0 0.0
    %256 = vmatpush1.msra.mxu0 0.0
    %257 = vmatprep.subr.mxu0 0.0
    %258 = vmatpush1.msra.mxu0 %v153
    %259 = vmatprep.subr.mxu0 0.0
    %260 = vmatpush1.msra.mxu0 %v152
    %261 = vmatprep.subr.mxu0 0.0
    %262 = vmatpush1.msra.mxu0 %v151
    %263 = vmatprep.subr.mxu0 0.0
    %264 = vmatpush1.msra.mxu0 %v150
    %265 = vmatprep.subr.mxu0 0.0
    %266 = vmatpush2.msra.mxu0 0.0
    %267 = vmatprep.subr.mxu0 0.0
    %268 = vmatpush2.msra.mxu0 0.0
    %269 = vmatprep.subr.mxu0 0.0
    %270 = vmatpush2.msra.mxu0 0.0
    %271 = vmatprep.subr.mxu0 0.0
    %272 = vmatpush2.msra.mxu0 0.0
    %273 = vmatprep.subr.mxu0 0.0
    %274 = vmatpush2.msra.mxu0 0.0
    %275 = vmatprep.subr.mxu0 0.0
    %276 = vmatpush2.msra.mxu0 0.0
    %277 = vmatprep.subr.mxu0 0.0
    %278 = vmatpush2.msra.mxu0 0.0
    %279 = vmatprep.subr.mxu0 0.0
    %280 = vmatpush2.msra.mxu0 0.0
    %281 = vmatprep.subr.mxu0 0.0
    %282 = vmatpush2.msra.mxu0 0.0
    %283 = vmatprep.subr.mxu0 0.0
    %284 = vmatpush2.msra.mxu0 0.0
    %285 = vmatprep.subr.mxu0 0.0
    %286 = vmatpush2.msra.mxu0 0.0
    %287 = vmatprep.subr.mxu0 0.0
    %288 = vmatpush2.msra.mxu0 0.0
    %289 = vmatprep.subr.mxu0 0.0
    %290 = vmatpush2.msra.mxu0 0.0
    %291 = vmatprep.subr.mxu0 0.0
    %292 = vmatpush2.msra.mxu0 0.0
    %293 = vmatprep.subr.mxu0 0.0
    %294 = vmatpush2.msra.mxu0 0.0
    %295 = vmatprep.subr.mxu0 0.0
    %296 = vmatpush2.msra.mxu0 0.0
    %297 = vmatprep.mubr.f32.mxu0 0.0
    %298 = vmatmul.mubr.f32.gmra.mxu0 %v231
    %v299 = vpop.f32.mrf.mxu0
    %v300 = vadd.f32 %v226, %v299
    %v301 = vpop.f32.mrf.mxu0
    %302 = vdwg.mxu0
    %v303 = vlaneseq
    %v304 = vshrl.u32 %v303, 7
    %v305 = vsub.s32 0, %v304
    %v306 = vrot.slane %v149, %v305
    %v307 = vadd.f32 %v300, %v306
    %vm308 = vcmp.gt.f32.partialorder %v307, 0.0
    %310 = vrot.lane.b32.xlu0 %v307, 64
    %v311 = vpop.permute.xlu0 %310
    %v313 = vmul.f32 %v307, %v311
    %315 = vrot.lane.b32.xlu0 %v313, 64
    %v316 = vpop.permute.xlu0 %315
    %v318 = vsel %vm308, %v307, %v316
    %v319 = vld [vmem:[%s4] sm:$0x1]
    %v320 = vld [vmem:[%s4 + $0x8] sm:$0xff]
    %v321 = vld [vmem:[%s4 + $0x10] sm:$0xff]
    %v322 = vld [vmem:[%s4 + $0x18] sm:$0xff]
    %v323 = vld [vmem:[%s4 + $0x20] sm:$0xff]
    %v324 = vld [vmem:[%s4 + $0x28] sm:$0xff]
    %v325 = vld [vmem:[%s4 + $0x30] sm:$0xff]
    %v326 = vld [vmem:[%s4 + $0x38] sm:$0xff]
    %v327 = vld [vmem:[%s4 + $0x40] sm:$0xff]
    %v328 = vld [vmem:[%s4 + $0x48] sm:$0xff]
    %329 = vmatprep.subr.mxu0 0.0
    %330 = vmatpush1.msra.mxu0 0.0
    %331 = vmatprep.subr.mxu0 0.0
    %332 = vmatpush1.msra.mxu0 0.0
    %333 = vmatprep.subr.mxu0 0.0
    %334 = vmatpush1.msra.mxu0 0.0
    %335 = vmatprep.subr.mxu0 0.0
    %336 = vmatpush1.msra.mxu0 0.0
    %337 = vmatprep.subr.mxu0 0.0
    %338 = vmatpush1.msra.mxu0 0.0
    %339 = vmatprep.subr.mxu0 0.0
    %340 = vmatpush1.msra.mxu0 0.0
    %341 = vmatprep.subr.mxu0 0.0
    %342 = vmatpush1.msra.mxu0 0.0
    %343 = vmatprep.subr.mxu0 0.0
    %344 = vmatpush1.msra.mxu0 0.0
    %345 = vmatprep.subr.mxu0 0.0
    %346 = vmatpush1.msra.mxu0 0.0
    %347 = vmatprep.subr.mxu0 0.0
    %348 = vmatpush1.msra.mxu0 0.0
    %349 = vmatprep.subr.mxu0 0.0
    %350 = vmatpush1.msra.mxu0 0.0
    %351 = vmatprep.subr.mxu0 0.0
    %352 = vmatpush1.msra.mxu0 0.0
    %353 = vmatprep.subr.mxu0 0.0
    %354 = vmatpush1.msra.mxu0 0.0
    %355 = vmatprep.subr.mxu0 0.0
    %356 = vmatpush1.msra.mxu0 0.0
    %357 = vmatprep.subr.mxu0 0.0
    %358 = vmatpush1.msra.mxu0 0.0
    %359 = vmatprep.subr.mxu0 0.0
    %360 = vmatpush1.msra.mxu0 %v328
    %361 = vmatprep.subr.mxu0 0.0
    %362 = vmatpush2.msra.mxu0 0.0
    %363 = vmatprep.subr.mxu0 0.0
    %364 = vmatpush2.msra.mxu0 0.0
    %365 = vmatprep.subr.mxu0 0.0
    %366 = vmatpush2.msra.mxu0 0.0
    %367 = vmatprep.subr.mxu0 0.0
    %368 = vmatpush2.msra.mxu0 0.0
    %369 = vmatprep.subr.mxu0 0.0
    %370 = vmatpush2.msra.mxu0 0.0
    %371 = vmatprep.subr.mxu0 0.0
    %372 = vmatpush2.msra.mxu0 0.0
    %373 = vmatprep.subr.mxu0 0.0
    %374 = vmatpush2.msra.mxu0 0.0
    %375 = vmatprep.subr.mxu0 0.0
    %376 = vmatpush2.msra.mxu0 0.0
    %377 = vmatprep.subr.mxu0 0.0
    %378 = vmatpush2.msra.mxu0 0.0
    %379 = vmatprep.subr.mxu0 0.0
    %380 = vmatpush2.msra.mxu0 0.0
    %381 = vmatprep.subr.mxu0 0.0
    %382 = vmatpush2.msra.mxu0 0.0
    %383 = vmatprep.subr.mxu0 0.0
    %384 = vmatpush2.msra.mxu0 0.0
    %385 = vmatprep.subr.mxu0 0.0
    %386 = vmatpush2.msra.mxu0 0.0
    %387 = vmatprep.subr.mxu0 0.0
    %388 = vmatpush2.msra.mxu0 0.0
    %389 = vmatprep.subr.mxu0 0.0
    %390 = vmatpush2.msra.mxu0 0.0
    %391 = vmatprep.subr.mxu0 0.0
    %392 = vmatpush2.msra.mxu0 0.0
    %393 = vmatprep.mubr.f32.mxu0 0.0
    %394 = vmatmul.mubr.f32.gmra.mxu0 %v157
    %v395 = vpop.f32.mrf.mxu0
    %v396 = vadd.f32 0.0, %v395
    %v397 = vpop.f32.mrf.mxu0
    %398 = vdwg.mxu0
    %vm399 = vcmask 523264
    %v401 = vsel %vm399, %v318, 0
    %403 = vmatprep.subr.mxu0 0.0
    %404 = vmatpush1.msra.mxu0 0.0
    %405 = vmatprep.subr.mxu0 0.0
    %406 = vmatpush1.msra.mxu0 0.0
    %407 = vmatprep.subr.mxu0 0.0
    %408 = vmatpush1.msra.mxu0 0.0
    %409 = vmatprep.subr.mxu0 0.0
    %410 = vmatpush1.msra.mxu0 0.0
    %411 = vmatprep.subr.mxu0 0.0
    %412 = vmatpush1.msra.mxu0 0.0
    %413 = vmatprep.subr.mxu0 0.0
    %414 = vmatpush1.msra.mxu0 0.0
    %415 = vmatprep.subr.mxu0 0.0
    %416 = vmatpush1.msra.mxu0 0.0
    %417 = vmatprep.subr.mxu0 0.0
    %418 = vmatpush1.msra.mxu0 0.0
    %419 = vmatprep.subr.mxu0 0.0
    %420 = vmatpush1.msra.mxu0 %v327
    %421 = vmatprep.subr.mxu0 0.0
    %422 = vmatpush1.msra.mxu0 %v326
    %423 = vmatprep.subr.mxu0 0.0
    %424 = vmatpush1.msra.mxu0 %v325
    %425 = vmatprep.subr.mxu0 0.0
    %426 = vmatpush1.msra.mxu0 %v324
    %427 = vmatprep.subr.mxu0 0.0
    %428 = vmatpush1.msra.mxu0 %v323
    %429 = vmatprep.subr.mxu0 0.0
    %430 = vmatpush1.msra.mxu0 %v322
    %431 = vmatprep.subr.mxu0 0.0
    %432 = vmatpush1.msra.mxu0 %v321
    %433 = vmatprep.subr.mxu0 0.0
    %434 = vmatpush1.msra.mxu0 %v320
    %435 = vmatprep.subr.mxu0 0.0
    %436 = vmatpush2.msra.mxu0 0.0
    %437 = vmatprep.subr.mxu0 0.0
    %438 = vmatpush2.msra.mxu0 0.0
    %439 = vmatprep.subr.mxu0 0.0
    %440 = vmatpush2.msra.mxu0 0.0
    %441 = vmatprep.subr.mxu0 0.0
    %442 = vmatpush2.msra.mxu0 0.0
    %443 = vmatprep.subr.mxu0 0.0
    %444 = vmatpush2.msra.mxu0 0.0
    %445 = vmatprep.subr.mxu0 0.0
    %446 = vmatpush2.msra.mxu0 0.0
    %447 = vmatprep.subr.mxu0 0.0
    %448 = vmatpush2.msra.mxu0 0.0
    %449 = vmatprep.subr.mxu0 0.0
    %450 = vmatpush2.msra.mxu0 0.0
    %451 = vmatprep.subr.mxu0 0.0
    %452 = vmatpush2.msra.mxu0 0.0
    %453 = vmatprep.subr.mxu0 0.0
    %454 = vmatpush2.msra.mxu0 0.0
    %455 = vmatprep.subr.mxu0 0.0
    %456 = vmatpush2.msra.mxu0 0.0
    %457 = vmatprep.subr.mxu0 0.0
    %458 = vmatpush2.msra.mxu0 0.0
    %459 = vmatprep.subr.mxu0 0.0
    %460 = vmatpush2.msra.mxu0 0.0
    %461 = vmatprep.subr.mxu0 0.0
    %462 = vmatpush2.msra.mxu0 0.0
    %463 = vmatprep.subr.mxu0 0.0
    %464 = vmatpush2.msra.mxu0 0.0
    %465 = vmatprep.subr.mxu0 0.0
    %466 = vmatpush2.msra.mxu0 0.0
    %467 = vmatprep.mubr.f32.mxu0 0.0
    %468 = vmatmul.mubr.f32.gmra.mxu0 %v401
    %v469 = vpop.f32.mrf.mxu0
    %v470 = vadd.f32 %v396, %v469
    %v471 = vpop.f32.mrf.mxu0
    %472 = vdwg.mxu0
    %v473 = vlaneseq
    %v474 = vshrl.u32 %v473, 7
    %v475 = vsub.s32 0, %v474
    %v476 = vrot.slane %v319, %v475
    %v477 = vadd.f32 %v470, %v476
    %vm478 = vcmp.gt.f32.partialorder %v477, 0.0
    %480 = vrot.lane.b32.xlu0 %v477, 16
    %v481 = vpop.permute.xlu0 %480
    %v483 = vmul.f32 %v477, %v481
    %485 = vrot.lane.b32.xlu0 %v483, 112
    %v486 = vpop.permute.xlu0 %485
    %v488 = vsel %vm478, %v477, %v486
    %vm489 = vcmask 130048
    %v490 = vsel %vm489, %v488, -inf
    %491 = vmax.xlane.f32.xlu0 %v490
    %v492 = vpop.xlane.xlu0 %491
    %v493 = vsub.f32 %v488, %v492
    %v494 = vmul.f32 %v493, 1.442695
    %v495 = vpow.pop %v494
    %v496 = vsel %vm489, %v495, 0.0
    %497 = vadd.xlane.f32.xlu0 %v496
    %v498 = vpop.xlane.xlu0 %497
    %v499 = vrcp.pop %v498
    %v500 = vmul.f32 %v495, %v499
    %501 = vst.msk [vmem:[#allocation2] sm:$0xff] %vm489, %v500
    // Predicated region
    $region22: #{tpu_custom_call.1} parent=1 // pred_check
      _
    $region23: #{tpu_custom_call.1} parent=1 // pred_check_branch
      %503 = sbr.rel (0) target = $region25
    $region24: #{tpu_custom_call.1} parent=1 // pred_region
      %s505 = ssub.s32 128, 128
      %506 = vsyncadd [#allocation3], %s505
      %s508 = sshll.u32 [#allocation2], 4
      %s509 = int_to_ptr.vmem [resolvable:$true] %s508
      %511 = dma.vmem_to_hbm [thread:$0]  %s509, 128, %s5, [#allocation3]
    $region25: #{tpu_custom_call.1} parent=1 // pred_fallthru
      _
    // Predicated region
    $region26: #{tpu_custom_call.1} parent=1 // pred_check
      _
    $region27: #{tpu_custom_call.1} parent=1 // pred_check_branch
      %513 = sbr.rel (0) target = $region29
    $region28: #{tpu_custom_call.1} parent=1 // pred_region
      %514 = dma.done [#allocation3], 128
    $region29: #{tpu_custom_call.1} parent=1 // pred_fallthru
      _
    %515 = vsyncpa [#allocation3], 1

</llo_original>
